<compile_context>
chip_gen: v7x
topology: tpu7x:2x2x1
jax: 0.10.0
libtpu: 0.0.40
codegen_flags: <defaults>
</compile_context>

<pallas_src>
import functools
import inspect

import jax
import jax.numpy as jnp
from jax.experimental import pallas as pl
from jax.experimental.pallas import tpu as pltpu


# ----------------------------------------------------------------------------
# Small helpers
# ----------------------------------------------------------------------------
def _round_up(x, m):
    return ((x + m - 1) // m) * m


def _sublane_multiple(dtype):
    # Packed-sublane tile: 8 rows for 4-byte, 16 for 2-byte, 32 for 1-byte.
    return max(8, 32 // jnp.dtype(dtype).itemsize)


def _has_pipeline_mode():
    try:
        return hasattr(pl, "Buffered") and (
            "pipeline_mode" in inspect.signature(pl.BlockSpec).parameters)
    except (TypeError, ValueError):
        return hasattr(pl, "Buffered")


_HAS_PIPELINE_MODE = _has_pipeline_mode()


def _spec(shape, index_map, *, single_buffer=False):
    """BlockSpec; constant-index operands get single-buffered to halve VMEM."""
    if single_buffer and _HAS_PIPELINE_MODE:
        return pl.BlockSpec(shape, index_map, pipeline_mode=pl.Buffered(1))
    return pl.BlockSpec(shape, index_map)


def _vmem_limit_bytes():
    """Generation-aware VMEM limit with headroom for Mosaic internals."""
    try:
        cap = int(pltpu.get_tpu_info().vmem_capacity_bytes)
    except Exception:
        cap = 64 << 20  # conservative fallback, valid on every generation
    return int(cap * 0.8)  # ≈51 MiB on v7x, ≈102 MiB on v5e/v6e


def _pick_hidden_tile(hp, target):
    """Largest multiple of 128 that divides hp and is <= target (>=128)."""
    best, t, cap = 128, 128, min(target, hp)
    while t <= cap:
        if hp % t == 0:
            best = t
        t += 128
    return best


def _choose_tiles(n_rows, dp, hp, x_item, w_item, out_item,
                  row_tile, hidden_tile, sub, vmem_budget):
    tm = min(row_tile, _round_up(n_rows, sub))
    tm = max(sub, _round_up(tm, sub))
    th = _pick_hidden_tile(hp, hidden_tile)

    def est(tm_, th_):
        n_h = hp // th_
        w_bufs = 1 if n_h == 1 else 2                      # resident vs streamed
        weights = w_bufs * (2 * dp * th_ + th_) * w_item   # W_up + W_dn + b_up
        io_bufs = 2 * tm_ * dp * (x_item + out_item)       # double-buffered x/out
        acc = tm_ * dp * 4                                 # f32 accumulator
        inter = 2 * tm_ * th_ * 4 + 3 * tm_ * dp * 4       # live f32 intermediates
        small = 8 * dp * 4                                 # biases/gamma/beta/mask
        return weights + io_bufs + acc + inter + small

    # Shrink the hidden tile first (weights dominate for large D) ...
    while est(tm, th) > vmem_budget and th > 128:
        new_th = _pick_hidden_tile(hp, th - 128)
        if new_th >= th:
            break
        th = new_th
    # ... then the row tile.
    while est(tm, th) > vmem_budget and tm > sub:
        tm = max(sub, _round_up(tm // 2, sub))
        if tm == sub:
            break
    return tm, th


# ----------------------------------------------------------------------------
# Kernel
# ----------------------------------------------------------------------------
def san_block_kernel(x_ref, w_up_ref, b_up_ref, w_dn_ref, b_dn_ref,
                     gamma_ref, beta_ref, *rest, eps, d_valid, use_mask):
    if use_mask:
        mask_ref, o_ref, acc_ref = rest
    else:
        mask_ref = None
        o_ref, acc_ref = rest

    j = pl.program_id(1)
    n_h = pl.num_programs(1)

    @pl.when(j == 0)
    def _init():
        acc_ref[...] = jnp.zeros_like(acc_ref)

    x = x_ref[...]                                           # (tm, Dp) native dtype

    # fc_up chunk: (tm, Dp) @ (Dp, th); bias + ReLU on the f32 accumulator.
    h = jnp.dot(x, w_up_ref[...], preferred_element_type=jnp.float32)
    h = jnp.maximum(h + b_up_ref[...].astype(jnp.float32), 0.0)

    # fc_down chunk: (tm, th) @ (th, Dp), accumulated in f32 VMEM scratch.
    acc_ref[...] += jnp.dot(h.astype(w_dn_ref.dtype), w_dn_ref[...],
                            preferred_element_type=jnp.float32)

    @pl.when(j == n_h - 1)
    def _finalize():
        y = acc_ref[...] + b_dn_ref[...].astype(jnp.float32)
        # Residual in f32. Padded lanes of x and y are exactly 0 => padded z == 0.
        z = y + x.astype(jnp.float32)

        inv_d = jnp.float32(1.0 / d_valid)
        mean = jnp.sum(z, axis=-1, keepdims=True) * inv_d
        centered = z - mean
        if use_mask:  # precomputed (1, Dp) f32 mask: zero the padded lanes
            centered = centered * mask_ref[...]
        var = jnp.sum(centered * centered, axis=-1, keepdims=True) * inv_d
        inv = jax.lax.rsqrt(var + eps)
        out = (centered * inv * gamma_ref[...].astype(jnp.float32)
               + beta_ref[...].astype(jnp.float32))
        o_ref[...] = out.astype(o_ref.dtype)


# ----------------------------------------------------------------------------
# Parameter preparation (call once at model setup; weights are static)
# ----------------------------------------------------------------------------
def prepare_san_params(w_up, b_up, w_dn, b_dn, gamma, beta, *, param_dtype=None):
    D, H = w_up.shape
    Dp, Hp = _round_up(D, 128), _round_up(H, 128)

    if param_dtype is not None:
        w_up = w_up.astype(param_dtype)
        w_dn = w_dn.astype(param_dtype)

    def pad2(a, r, c):
        if a.shape == (r, c):
            return a  # no-op: no extra HBM traffic
        return jnp.zeros((r, c), a.dtype).at[:a.shape[0], :a.shape[1]].set(a)

    def pad_row(v, c):
        v = v.reshape(1, -1)
        if v.shape[1] == c:
            return v
        return jnp.zeros((1, c), v.dtype).at[:, :v.shape[1]].set(v)

    mask = None
    if Dp != D:
        mask = (jnp.arange(Dp, dtype=jnp.int32) < D).astype(jnp.float32).reshape(1, Dp)

    return dict(
        d=D, h=H, dp=Dp, hp=Hp,
        w_up=pad2(w_up, Dp, Hp), b_up=pad_row(b_up, Hp),
        w_dn=pad2(w_dn, Hp, Dp), b_dn=pad_row(b_dn, Dp),
        gamma=pad_row(gamma, Dp), beta=pad_row(beta, Dp),
        mask=mask,
    )


# ----------------------------------------------------------------------------
# Wrapper
# ----------------------------------------------------------------------------
def san_block(hidden_states, w_up=None, b_up=None, w_dn=None, b_dn=None,
              gamma=None, beta=None, *, prepared=None, eps=1e-5,
              row_tile=256, hidden_tile=512, mxu_dtype=None):
    """SANBlock forward.  Pass `prepared=prepare_san_params(...)` to avoid
    re-padding weights on every call.  `mxu_dtype=jnp.bfloat16` (optional)
    feeds the MXU bf16 while keeping f32 accumulation / post-matmul math."""
    if prepared is None:
        prepared = prepare_san_params(w_up, b_up, w_dn, b_dn, gamma, beta,
                                      param_dtype=mxu_dtype)
    p = prepared
    D, Dp, Hp = p["d"], p["dp"], p["hp"]

    orig_shape = hidden_states.shape
    out_dtype = hidden_states.dtype
    x2d = hidden_states.reshape(-1, D)
    N = x2d.shape[0]

    x_dtype = out_dtype if mxu_dtype is None else mxu_dtype
    if x2d.dtype != x_dtype:
        x2d = x2d.astype(x_dtype)

    x_item = jnp.dtype(x_dtype).itemsize
    w_item = jnp.dtype(p["w_up"].dtype).itemsize
    out_item = jnp.dtype(out_dtype).itemsize
    sub = max(_sublane_multiple(x_dtype), _sublane_multiple(out_dtype))

    vmem_limit = _vmem_limit_bytes()
    tm, th = _choose_tiles(N, Dp, Hp, x_item, w_item, out_item,
                           row_tile, hidden_tile, sub, vmem_limit)
    n_h = Hp // th
    stream_weights = n_h > 1

    pad_lanes = p["mask"] is not None
    if pad_lanes:
        # Lane padding is required (zero lanes so residual/mean stay exact);
        # pad rows in the same op so every block is full.
        Np = _round_up(N, tm)
        xk = jnp.zeros((Np, Dp), x_dtype).at[:N, :D].set(x2d)
        n_rows, out_rows = Np // tm, Np
    else:
        # No padding traffic: cdiv grid; out-of-bounds output rows are discarded.
        xk = x2d
        n_rows, out_rows = pl.cdiv(N, tm), N

    kernel = functools.partial(san_block_kernel, eps=float(eps), d_valid=D,
                               use_mask=pad_lanes)

    in_specs = [
        pl.BlockSpec((tm, Dp), lambda i, j: (i, 0)),                              # x (resident over j)
        _spec((Dp, th), lambda i, j: (0, j), single_buffer=not stream_weights),   # W_up chunk
        _spec((1, th), lambda i, j: (0, j), single_buffer=not stream_weights),    # b_up chunk
        _spec((th, Dp), lambda i, j: (j, 0), single_buffer=not stream_weights),   # W_down chunk
        _spec((1, Dp), lambda i, j: (0, 0), single_buffer=True),                  # b_down
        _spec((1, Dp), lambda i, j: (0, 0), single_buffer=True),                  # gamma
        _spec((1, Dp), lambda i, j: (0, 0), single_buffer=True),                  # beta
    ]
    args = [xk, p["w_up"], p["b_up"], p["w_dn"], p["b_dn"], p["gamma"], p["beta"]]
    if pad_lanes:
        in_specs.append(_spec((1, Dp), lambda i, j: (0, 0), single_buffer=True))  # lane mask
        args.append(p["mask"])

    weight_reads = 1 if not stream_weights else n_rows
    cost = pl.CostEstimate(
        flops=int(4 * N * D * p["h"]),                      # two matmuls
        transcendentals=int(N),                             # one rsqrt per row
        bytes_accessed=int(N * Dp * (x_item + out_item)
                           + weight_reads * 2 * Dp * Hp * w_item
                           + (Hp + 3 * Dp) * 4),
    )

    out = pl.pallas_call(
        kernel,
        out_shape=jax.ShapeDtypeStruct((out_rows, Dp), out_dtype),
        grid_spec=pltpu.PrefetchScalarGridSpec(
            num_scalar_prefetch=0,
            grid=(n_rows, n_h),
            in_specs=in_specs,
            out_specs=pl.BlockSpec((tm, Dp), lambda i, j: (i, 0)),
            scratch_shapes=[pltpu.VMEM((tm, Dp), jnp.float32)],
        ),
        compiler_params=pltpu.CompilerParams(
            dimension_semantics=("parallel", "arbitrary"),
            vmem_limit_bytes=vmem_limit,
        ),
        cost_estimate=cost,
    )(*args)

    if out.shape != (N, D):
        out = out[:N, :D]
    return out.reshape(orig_shape)


# ----------------------------------------------------------------------------
# Pure-JAX reference (torch semantics: biased variance, eps inside rsqrt)
# ----------------------------------------------------------------------------
def san_block_ref(x, w_up, b_up, w_dn, b_dn, gamma, beta, eps=1e-5):
    h = jnp.maximum(x @ w_up + b_up, 0.0)
    y = h @ w_dn + b_dn
    z = y + x
    mean = jnp.mean(z, axis=-1, keepdims=True)
    var = jnp.mean((z - mean) ** 2, axis=-1, keepdims=True)
    return (z - mean) * jax.lax.rsqrt(var + eps) * gamma + beta


if __name__ == "__main__":
    # Small shapes consistent with the module: batch=2, seq=8, hidden=32
    B, S, D = 2, 8, 32
    key = jax.random.PRNGKey(0)
    kx, k1, k2, k3, k4 = jax.random.split(key, 5)

    hidden_states = jax.random.normal(kx, (B, S, D), dtype=jnp.float32)

    # fc_up: Linear(D, 2D), fc_down: Linear(2D, D), norm: LayerNorm(D)
    w_up = jax.random.normal(k1, (D, 2 * D), dtype=jnp.float32) * (1.0 / jnp.sqrt(D))
    b_up = jax.random.normal(k2, (2 * D,), dtype=jnp.float32) * 0.01
    w_dn = jax.random.normal(k3, (2 * D, D), dtype=jnp.float32) * (1.0 / jnp.sqrt(2 * D))
    b_dn = jax.random.normal(k4, (D,), dtype=jnp.float32) * 0.01
    gamma = jnp.ones((D,), dtype=jnp.float32)
    beta = jnp.zeros((D,), dtype=jnp.float32)

    # Pad/layout the static parameters once (as a model would at setup).
    prepared = prepare_san_params(w_up, b_up, w_dn, b_dn, gamma, beta)

    out = san_block(hidden_states, prepared=prepared)
    out = jax.block_until_ready(out)

    ref = san_block_ref(hidden_states, w_up, b_up, w_dn, b_dn, gamma, beta)
    assert out.shape == hidden_states.shape
    assert jnp.allclose(out, ref, atol=1e-5, rtol=1e-5), "mismatch vs reference"

    print("KERNEL_OK")
</pallas_src>

<mosaic_0001>
module attributes {stable_mosaic.version = 11 : i64} {
  func.func @san_block_kernel(%arg0: i32, %arg1: i32, %arg2: memref<16x128xf32, #tpu.memory_space<vmem>>, %arg3: memref<128x128xf32, #tpu.memory_space<vmem>>, %arg4: memref<1x128xf32, #tpu.memory_space<vmem>>, %arg5: memref<128x128xf32, #tpu.memory_space<vmem>>, %arg6: memref<1x128xf32, #tpu.memory_space<vmem>>, %arg7: memref<1x128xf32, #tpu.memory_space<vmem>>, %arg8: memref<1x128xf32, #tpu.memory_space<vmem>>, %arg9: memref<1x128xf32, #tpu.memory_space<vmem>>, %arg10: memref<16x128xf32, #tpu.memory_space<vmem>>, %arg11: memref<16x128xf32, #tpu.memory_space<vmem>>) attributes {dimension_semantics = [#tpu.dimension_semantics<parallel>, #tpu.dimension_semantics<arbitrary>], iteration_bounds = array<i64: 1, 1>, scalar_prefetch = 0 : i64, scratch_operands = 1 : i64, tpu.core_type = #tpu.core_type<tc>, window_params = [{transform_indices = @transform_0, window_bounds = array<i64: 16, 128>}, {pipeline_mode = #tpu.pipeline_mode<synchronous>, transform_indices = @transform_1, window_bounds = array<i64: 128, 128>}, {pipeline_mode = #tpu.pipeline_mode<synchronous>, transform_indices = @transform_2, window_bounds = array<i64: 1, 128>}, {pipeline_mode = #tpu.pipeline_mode<synchronous>, transform_indices = @transform_3, window_bounds = array<i64: 128, 128>}, {pipeline_mode = #tpu.pipeline_mode<synchronous>, transform_indices = @transform_4, window_bounds = array<i64: 1, 128>}, {pipeline_mode = #tpu.pipeline_mode<synchronous>, transform_indices = @transform_5, window_bounds = array<i64: 1, 128>}, {pipeline_mode = #tpu.pipeline_mode<synchronous>, transform_indices = @transform_6, window_bounds = array<i64: 1, 128>}, {pipeline_mode = #tpu.pipeline_mode<synchronous>, transform_indices = @transform_7, window_bounds = array<i64: 1, 128>}, {transform_indices = @transform_8, window_bounds = array<i64: 16, 128>}]} {
    %c0_i32 = arith.constant 0 : i32
    %0 = arith.cmpi eq, %arg1, %c0_i32 : i32
    %1 = arith.extui %0 : i1 to i32
    %c0_i32_0 = arith.constant 0 : i32
    %2 = arith.cmpi ne, %1, %c0_i32_0 : i32
    scf.if %2 {
      %cst_16 = arith.constant 0.000000e+00 : f32
      %19 = vector.broadcast %cst_16 : f32 to vector<16x128xf32>
      %c0_17 = arith.constant 0 : index
      %c0_18 = arith.constant 0 : index
      %20 = vector.load %arg11[%c0_17, %c0_18] : memref<16x128xf32, #tpu.memory_space<vmem>>, vector<16x128xf32>
      tpu.vector_store %arg11[%c0_17, %c0_18], %19 {strides = array<i32>} : memref<16x128xf32, #tpu.memory_space<vmem>>, vector<16x128xf32>,
    } else {
    }
    %c0 = arith.constant 0 : index
    %c0_1 = arith.constant 0 : index
    %3 = vector.load %arg2[%c0, %c0_1] : memref<16x128xf32, #tpu.memory_space<vmem>>, vector<16x128xf32>
    %c0_2 = arith.constant 0 : index
    %c0_3 = arith.constant 0 : index
    %4 = vector.load %arg3[%c0_2, %c0_3] : memref<128x128xf32, #tpu.memory_space<vmem>>, vector<128x128xf32>
    %cst = arith.constant dense<0.000000e+00> : vector<16x128xf32>
    %5 = tpu.matmul %3, %4, %cst {dimension_numbers = #tpu.dot_dimension_numbers<[1], [0], [0], [1], [0, 0, 1, 1], [], []>} : vector<16x128xf32>, vector<128x128xf32>, vector<16x128xf32> -> vector<16x128xf32>
    %c0_4 = arith.constant 0 : index
    %c0_5 = arith.constant 0 : index
    %6 = vector.load %arg4[%c0_4, %c0_5] : memref<1x128xf32, #tpu.memory_space<vmem>>, vector<1x128xf32>
    %7 = vector.broadcast %6 : vector<1x128xf32> to vector<16x128xf32>
    %8 = arith.addf %5, %7 : vector<16x128xf32>
    %cst_6 = arith.constant 0.000000e+00 : f32
    %9 = vector.broadcast %cst_6 : f32 to vector<16x128xf32>
    %10 = arith.maximumf %8, %9 : vector<16x128xf32>
    %c0_7 = arith.constant 0 : index
    %c0_8 = arith.constant 0 : index
    %11 = vector.load %arg11[%c0_7, %c0_8] : memref<16x128xf32, #tpu.memory_space<vmem>>, vector<16x128xf32>
    %c0_9 = arith.constant 0 : index
    %c0_10 = arith.constant 0 : index
    %12 = vector.load %arg5[%c0_9, %c0_10] : memref<128x128xf32, #tpu.memory_space<vmem>>, vector<128x128xf32>
    %cst_11 = arith.constant dense<0.000000e+00> : vector<16x128xf32>
    %13 = tpu.matmul %10, %12, %cst_11 {dimension_numbers = #tpu.dot_dimension_numbers<[1], [0], [0], [1], [0, 0, 1, 1], [], []>} : vector<16x128xf32>, vector<128x128xf32>, vector<16x128xf32> -> vector<16x128xf32>
    %14 = arith.addf %11, %13 : vector<16x128xf32>
    %c0_12 = arith.constant 0 : index
    %c0_13 = arith.constant 0 : index
    %15 = vector.load %arg11[%c0_12, %c0_13] : memref<16x128xf32, #tpu.memory_space<vmem>>, vector<16x128xf32>
    tpu.vector_store %arg11[%c0_12, %c0_13], %14 {strides = array<i32>} : memref<16x128xf32, #tpu.memory_space<vmem>>, vector<16x128xf32>,
    %c0_i32_14 = arith.constant 0 : i32
    %16 = arith.cmpi eq, %arg1, %c0_i32_14 : i32
    %17 = arith.extui %16 : i1 to i32
    %c0_i32_15 = arith.constant 0 : i32
    %18 = arith.cmpi ne, %17, %c0_i32_15 : i32
    scf.if %18 {
      %c0_16 = arith.constant 0 : index
      %c0_17 = arith.constant 0 : index
      %19 = vector.load %arg11[%c0_16, %c0_17] : memref<16x128xf32, #tpu.memory_space<vmem>>, vector<16x128xf32>
      %c0_18 = arith.constant 0 : index
      %c0_19 = arith.constant 0 : index
      %20 = vector.load %arg6[%c0_18, %c0_19] : memref<1x128xf32, #tpu.memory_space<vmem>>, vector<1x128xf32>
      %21 = vector.broadcast %20 : vector<1x128xf32> to vector<16x128xf32>
      %22 = arith.addf %19, %21 : vector<16x128xf32>
      %23 = arith.addf %22, %3 : vector<16x128xf32>
      %cst_20 = arith.constant dense<0.000000e+00> : vector<16xf32>
      %24 = vector.multi_reduction <add>, %23, %cst_20 [1] : vector<16x128xf32> to vector<16xf32>
      %25 = vector.shape_cast %24 : vector<16xf32> to vector<16x1xf32>
      %cst_21 = arith.constant 3.125000e-02 : f32
      %26 = vector.broadcast %cst_21 : f32 to vector<16x1xf32>
      %27 = arith.mulf %25, %26 : vector<16x1xf32>
      %28 = vector.broadcast %27 : vector<16x1xf32> to vector<16x128xf32>
      %29 = arith.subf %23, %28 : vector<16x128xf32>
      %c0_22 = arith.constant 0 : index
      %c0_23 = arith.constant 0 : index
      %30 = vector.load %arg9[%c0_22, %c0_23] : memref<1x128xf32, #tpu.memory_space<vmem>>, vector<1x128xf32>
      %31 = vector.broadcast %30 : vector<1x128xf32> to vector<16x128xf32>
      %32 = arith.mulf %29, %31 : vector<16x128xf32>
      %33 = arith.mulf %32, %32 : vector<16x128xf32>
      %cst_24 = arith.constant dense<0.000000e+00> : vector<16xf32>
      %34 = vector.multi_reduction <add>, %33, %cst_24 [1] : vector<16x128xf32> to vector<16xf32>
      %35 = vector.shape_cast %34 : vector<16xf32> to vector<16x1xf32>
      %cst_25 = arith.constant 3.125000e-02 : f32
      %36 = vector.broadcast %cst_25 : f32 to vector<16x1xf32>
      %37 = arith.mulf %35, %36 : vector<16x1xf32>
      %cst_26 = arith.constant 9.99999974E-6 : f32
      %38 = vector.broadcast %cst_26 : f32 to vector<16x1xf32>
      %39 = arith.addf %37, %38 : vector<16x1xf32>
      %40 = math.rsqrt %39 : vector<16x1xf32>
      %41 = vector.broadcast %40 : vector<16x1xf32> to vector<16x128xf32>
      %42 = arith.mulf %32, %41 : vector<16x128xf32>
      %c0_27 = arith.constant 0 : index
      %c0_28 = arith.constant 0 : index
      %43 = vector.load %arg7[%c0_27, %c0_28] : memref<1x128xf32, #tpu.memory_space<vmem>>, vector<1x128xf32>
      %44 = vector.broadcast %43 : vector<1x128xf32> to vector<16x128xf32>
      %45 = arith.mulf %42, %44 : vector<16x128xf32>
      %c0_29 = arith.constant 0 : index
      %c0_30 = arith.constant 0 : index
      %46 = vector.load %arg8[%c0_29, %c0_30] : memref<1x128xf32, #tpu.memory_space<vmem>>, vector<1x128xf32>
      %47 = vector.broadcast %46 : vector<1x128xf32> to vector<16x128xf32>
      %48 = arith.addf %45, %47 : vector<16x128xf32>
      %c0_31 = arith.constant 0 : index
      %c0_32 = arith.constant 0 : index
      %49 = vector.load %arg10[%c0_31, %c0_32] : memref<16x128xf32, #tpu.memory_space<vmem>>, vector<16x128xf32>
      tpu.vector_store %arg10[%c0_31, %c0_32], %48 {strides = array<i32>} : memref<16x128xf32, #tpu.memory_space<vmem>>, vector<16x128xf32>,
    } else {
    }
    return
  }
  func.func @transform_0(%arg0: i32, %arg1: i32) -> (i32, i32) {
    %c0_i32 = arith.constant 0 : i32
    %c0_i32_0 = arith.constant 0 : i32
    return %arg0, %c0_i32 : i32, i32
  }
  func.func @transform_1(%arg0: i32, %arg1: i32) -> (i32, i32) {
    %c0_i32 = arith.constant 0 : i32
    %c0_i32_0 = arith.constant 0 : i32
    return %c0_i32, %arg1 : i32, i32
  }
  func.func @transform_2(%arg0: i32, %arg1: i32) -> (i32, i32) {
    %c0_i32 = arith.constant 0 : i32
    %c0_i32_0 = arith.constant 0 : i32
    return %c0_i32, %arg1 : i32, i32
  }
  func.func @transform_3(%arg0: i32, %arg1: i32) -> (i32, i32) {
    %c0_i32 = arith.constant 0 : i32
    %c0_i32_0 = arith.constant 0 : i32
    return %arg1, %c0_i32 : i32, i32
  }
  func.func @transform_4(%arg0: i32, %arg1: i32) -> (i32, i32) {
    %c0_i32 = arith.constant 0 : i32
    %c0_i32_0 = arith.constant 0 : i32
    %c0_i32_1 = arith.constant 0 : i32
    return %c0_i32, %c0_i32_0 : i32, i32
  }
  func.func @transform_5(%arg0: i32, %arg1: i32) -> (i32, i32) {
    %c0_i32 = arith.constant 0 : i32
    %c0_i32_0 = arith.constant 0 : i32
    %c0_i32_1 = arith.constant 0 : i32
    return %c0_i32, %c0_i32_0 : i32, i32
  }
  func.func @transform_6(%arg0: i32, %arg1: i32) -> (i32, i32) {
    %c0_i32 = arith.constant 0 : i32
    %c0_i32_0 = arith.constant 0 : i32
    %c0_i32_1 = arith.constant 0 : i32
    return %c0_i32, %c0_i32_0 : i32, i32
  }
  func.func @transform_7(%arg0: i32, %arg1: i32) -> (i32, i32) {
    %c0_i32 = arith.constant 0 : i32
    %c0_i32_0 = arith.constant 0 : i32
    %c0_i32_1 = arith.constant 0 : i32
    return %c0_i32, %c0_i32_0 : i32, i32
  }
  func.func @transform_8(%arg0: i32, %arg1: i32) -> (i32, i32) {
    %c0_i32 = arith.constant 0 : i32
    %c0_i32_0 = arith.constant 0 : i32
    return %arg0, %c0_i32 : i32, i32
  }
}

</mosaic_0001>

<llo_original>
// kernel: tpu_custom_call.1
$region0: #{tpu_custom_call.1}
  #allocation0 [shape = 'u32[]', space=smem, size = 0x4, offset = 0x4, fixed_abs, tag = 'smem constant byte address 0x4 - core index']
  #allocation1 [shape = 'u32[144,128]{1,0:T(1,128)}', space=vmem, size = 0x12000, scoped, tag = 'internal scratch']
  #allocation2 [shape = 'f32[16,128]{1,0:T(8,128)}', space=vmem, size = 0x2000, scoped, tag = 'scratch operand']
  %s0 = inlined_call_operand.hbm [shape: f32[16,128], index: 0, kind: input, shape index: {}]
  %s1 = inlined_call_operand.hbm [shape: f32[128,128], index: 1, kind: input, shape index: {}]
  %s2 = inlined_call_operand.vmem [shape: f32[1,128], index: 2, kind: input, shape index: {}]
  %s3 = inlined_call_operand.hbm [shape: f32[128,128], index: 3, kind: input, shape index: {}]
  %s4 = inlined_call_operand.vmem [shape: f32[1,128], index: 4, kind: input, shape index: {}]
  %s5 = inlined_call_operand.vmem [shape: f32[1,128], index: 5, kind: input, shape index: {}]
  %s6 = inlined_call_operand.vmem [shape: f32[1,128], index: 6, kind: input, shape index: {}]
  %s7 = inlined_call_operand.vmem [shape: f32[1,128], index: 7, kind: input, shape index: {}]
  %s8 = inlined_call_operand.hbm [shape: f32[16,128], index: 8, kind: output, shape index: {}]
  %s9 = sld [smem:[#allocation0]]
  $region62: #{tpu_custom_call.1} parent=0
    _
  %s11 = ssub.s32 1, %s9
  %s12 = scalar_select 0, %s11, %s9
  $region1: #{tpu_custom_call.1} parent=0
    #allocation3 [shape = 'u8[8192]{0}', space=vmem, size = 0x2000, scoped, tag = 'input window, operand 0, single buffered']
    #allocation4 [shape = 's32[1]{0}', space=sflag, size = 0x4, scoped, tag = 'scoped memory for tpu_custom_call.1']
    #allocation5 [shape = 's32[1]{0}', space=sflag, size = 0x4, scoped, tag = 'scoped memory for tpu_custom_call.1']
    #allocation6 [shape = 'u8[65536]{0}', space=vmem, size = 0x10000, scoped, tag = 'input window, operand 1, single buffered']
    #allocation7 [shape = 's32[1]{0}', space=sflag, size = 0x4, scoped, tag = 'scoped memory for tpu_custom_call.1']
    #allocation8 [shape = 'u8[65536]{0}', space=vmem, size = 0x10000, scoped, tag = 'input window, operand 3, single buffered']
    #allocation9 [shape = 'u8[8192]{0}', space=vmem, size = 0x2000, scoped, tag = 'output window, operand 0, single buffered']
    %13 = vsyncpa [#allocation4], 0
    %14 = vsyncpa [#allocation7], 0
    %15 = vsyncpa [#allocation5], 0
    // Predicated region
    $region2: #{tpu_custom_call.1} parent=1 // pred_check
      _
    $region3: #{tpu_custom_call.1} parent=1 // pred_check_branch
      %17 = sbr.rel (0) target = $region5
    $region4: #{tpu_custom_call.1} parent=1 // pred_region
      %s19 = ssub.s32 256, 256
      %20 = vsyncadd [#allocation4], %s19
      %s21 = sshll.u32 [#allocation3], 4
      %s22 = int_to_ptr.vmem [resolvable:$true] %s21
      %27 = dma.hbm_to_vmem [thread:$0]  %s0, 256, %s22, [#allocation4], 128, 128, 8
    $region5: #{tpu_custom_call.1} parent=1 // pred_fallthru
      _
    // Predicated region
    $region6: #{tpu_custom_call.1} parent=1 // pred_check
      _
    $region7: #{tpu_custom_call.1} parent=1 // pred_check_branch
      %29 = sbr.rel (0) target = $region9
    $region8: #{tpu_custom_call.1} parent=1 // pred_region
      %s31 = ssub.s32 2048, 2048
      %32 = vsyncadd [#allocation7], %s31
      %s33 = sshll.u32 [#allocation6], 4
      %s34 = int_to_ptr.vmem [resolvable:$true] %s33
      %39 = dma.hbm_to_vmem [thread:$0]  %s1, 2048, %s34, [#allocation7], 128, 128, 8
    $region9: #{tpu_custom_call.1} parent=1 // pred_fallthru
      _
    // Predicated region
    $region10: #{tpu_custom_call.1} parent=1 // pred_check
      _
    $region11: #{tpu_custom_call.1} parent=1 // pred_check_branch
      %41 = sbr.rel (0) target = $region13
    $region12: #{tpu_custom_call.1} parent=1 // pred_region
      _
    $region13: #{tpu_custom_call.1} parent=1 // pred_fallthru
      _
    // Predicated region
    $region14: #{tpu_custom_call.1} parent=1 // pred_check
      _
    $region15: #{tpu_custom_call.1} parent=1 // pred_check_branch
      %43 = sbr.rel (0) target = $region17
    $region16: #{tpu_custom_call.1} parent=1 // pred_region
      %s45 = ssub.s32 2048, 2048
      %46 = vsyncadd [#allocation7], %s45
      %s47 = sshll.u32 [#allocation8], 4
      %s48 = int_to_ptr.vmem [resolvable:$true] %s47
      %53 = dma.hbm_to_vmem [thread:$0]  %s3, 2048, %s48, [#allocation7], 128, 128, 8
    $region17: #{tpu_custom_call.1} parent=1 // pred_fallthru
      _
    // Predicated region
    $region18: #{tpu_custom_call.1} parent=1 // pred_check
      _
    $region19: #{tpu_custom_call.1} parent=1 // pred_check_branch
      %55 = sbr.rel (0) target = $region21
    $region20: #{tpu_custom_call.1} parent=1 // pred_region
      _
    $region21: #{tpu_custom_call.1} parent=1 // pred_fallthru
      _
    // Predicated region
    $region22: #{tpu_custom_call.1} parent=1 // pred_check
      _
    $region23: #{tpu_custom_call.1} parent=1 // pred_check_branch
      %57 = sbr.rel (0) target = $region25
    $region24: #{tpu_custom_call.1} parent=1 // pred_region
      _
    $region25: #{tpu_custom_call.1} parent=1 // pred_fallthru
      _
    // Predicated region
    $region26: #{tpu_custom_call.1} parent=1 // pred_check
      _
    $region27: #{tpu_custom_call.1} parent=1 // pred_check_branch
      %59 = sbr.rel (0) target = $region29
    $region28: #{tpu_custom_call.1} parent=1 // pred_region
      _
    $region29: #{tpu_custom_call.1} parent=1 // pred_fallthru
      _
    // Predicated region
    $region30: #{tpu_custom_call.1} parent=1 // pred_check
      _
    $region31: #{tpu_custom_call.1} parent=1 // pred_check_branch
      %61 = sbr.rel (0) target = $region33
    $region32: #{tpu_custom_call.1} parent=1 // pred_region
      _
    $region33: #{tpu_custom_call.1} parent=1 // pred_fallthru
      _
    // Predicated region
    $region34: #{tpu_custom_call.1} parent=1 // pred_check
      _
    $region35: #{tpu_custom_call.1} parent=1 // pred_check_branch
      %63 = sbr.rel (0) target = $region37
    $region36: #{tpu_custom_call.1} parent=1 // pred_region
      %64 = dma.done [#allocation4], 256
    $region37: #{tpu_custom_call.1} parent=1 // pred_fallthru
      _
    // Predicated region
    $region38: #{tpu_custom_call.1} parent=1 // pred_check
      _
    $region39: #{tpu_custom_call.1} parent=1 // pred_check_branch
      %66 = sbr.rel (0) target = $region41
    $region40: #{tpu_custom_call.1} parent=1 // pred_region
      %67 = dma.done [#allocation7], 2048
    $region41: #{tpu_custom_call.1} parent=1 // pred_fallthru
      _
    // Predicated region
    $region42: #{tpu_custom_call.1} parent=1 // pred_check
      _
    $region43: #{tpu_custom_call.1} parent=1 // pred_check_branch
      %69 = sbr.rel (0) target = $region45
    $region44: #{tpu_custom_call.1} parent=1 // pred_region
      %70 = dma.done [#allocation7], 2048
    $region45: #{tpu_custom_call.1} parent=1 // pred_fallthru
      _
    %p71 = scmp.eq.s32.totalorder 0, 0
    // Predicated region
    $region46: #{tpu_custom_call.1} parent=1 // pred_check
      %p72 = pneg %p71
    $region47: #{tpu_custom_call.1} parent=1 // pred_check_branch
      %74 = sbr.rel (%p72) target = $region49
    $region48: #{tpu_custom_call.1} parent=1 // pred_region
      %75 = vst [vmem:[#allocation2] sm:$0xff] 0.0
      %76 = vst [vmem:[#allocation2 + $0x8] sm:$0xff] 0.0
    $region49: #{tpu_custom_call.1} parent=1 // pred_fallthru
      _
    %v77 = vld [vmem:[#allocation3] sm:$0xff]
    %v78 = vld [vmem:[#allocation3 + $0x8] sm:$0xff]
    %v79 = vld [vmem:[#allocation6] sm:$0xff]
    %v80 = vld [vmem:[#allocation6 + $0x8] sm:$0xff]
    %v81 = vld [vmem:[#allocation6 + $0x10] sm:$0xff]
    %v82 = vld [vmem:[#allocation6 + $0x18] sm:$0xff]
    %v83 = vld [vmem:[#allocation6 + $0x20] sm:$0xff]
    %v84 = vld [vmem:[#allocation6 + $0x28] sm:$0xff]
    %v85 = vld [vmem:[#allocation6 + $0x30] sm:$0xff]
    %v86 = vld [vmem:[#allocation6 + $0x38] sm:$0xff]
    %v87 = vld [vmem:[#allocation6 + $0x40] sm:$0xff]
    %v88 = vld [vmem:[#allocation6 + $0x48] sm:$0xff]
    %v89 = vld [vmem:[#allocation6 + $0x50] sm:$0xff]
    %v90 = vld [vmem:[#allocation6 + $0x58] sm:$0xff]
    %v91 = vld [vmem:[#allocation6 + $0x60] sm:$0xff]
    %v92 = vld [vmem:[#allocation6 + $0x68] sm:$0xff]
    %v93 = vld [vmem:[#allocation6 + $0x70] sm:$0xff]
    %v94 = vld [vmem:[#allocation6 + $0x78] sm:$0xff]
    %v95 = vld [vmem:[%s2] sm:$0x1]
    %v97 = vlaneseq
    %v98 = vshrl.u32 %v97, 7
    %v99 = vsub.s32 0, %v98
    %v100 = vrot.slane %v95, %v99
    %102 = vmatprep.subr.mxu0 0.0
    %103 = vmatpush1.msra.mxu0 %v79
    %104 = vmatprep.subr.mxu0 0.0
    %105 = vmatpush1.msra.mxu0 %v80
    %106 = vmatprep.subr.mxu0 0.0
    %107 = vmatpush1.msra.mxu0 %v81
    %108 = vmatprep.subr.mxu0 0.0
    %109 = vmatpush1.msra.mxu0 %v82
    %110 = vmatprep.subr.mxu0 0.0
    %111 = vmatpush1.msra.mxu0 %v83
    %112 = vmatprep.subr.mxu0 0.0
    %113 = vmatpush1.msra.mxu0 %v84
    %114 = vmatprep.subr.mxu0 0.0
    %115 = vmatpush1.msra.mxu0 %v85
    %116 = vmatprep.subr.mxu0 0.0
    %117 = vmatpush1.msra.mxu0 %v86
    %118 = vmatprep.subr.mxu0 0.0
    %119 = vmatpush1.msra.mxu0 %v87
    %120 = vmatprep.subr.mxu0 0.0
    %121 = vmatpush1.msra.mxu0 %v88
    %122 = vmatprep.subr.mxu0 0.0
    %123 = vmatpush1.msra.mxu0 %v89
    %124 = vmatprep.subr.mxu0 0.0
    %125 = vmatpush1.msra.mxu0 %v90
    %126 = vmatprep.subr.mxu0 0.0
    %127 = vmatpush1.msra.mxu0 %v91
    %128 = vmatprep.subr.mxu0 0.0
    %129 = vmatpush1.msra.mxu0 %v92
    %130 = vmatprep.subr.mxu0 0.0
    %131 = vmatpush1.msra.mxu0 %v93
    %132 = vmatprep.subr.mxu0 0.0
    %133 = vmatpush1.msra.mxu0 %v94
    %134 = vmatprep.subr.mxu0 0.0
    %135 = vmatpush1.msra.mxu0 0.0
    %136 = vmatprep.subr.mxu0 0.0
    %137 = vmatpush1.msra.mxu0 0.0
    %138 = vmatprep.subr.mxu0 0.0
    %139 = vmatpush1.msra.mxu0 0.0
    %140 = vmatprep.subr.mxu0 0.0
    %141 = vmatpush1.msra.mxu0 0.0
    %142 = vmatprep.subr.mxu0 0.0
    %143 = vmatpush1.msra.mxu0 0.0
    %144 = vmatprep.subr.mxu0 0.0
    %145 = vmatpush1.msra.mxu0 0.0
    %146 = vmatprep.subr.mxu0 0.0
    %147 = vmatpush1.msra.mxu0 0.0
    %148 = vmatprep.subr.mxu0 0.0
    %149 = vmatpush1.msra.mxu0 0.0
    %150 = vmatprep.subr.mxu0 0.0
    %151 = vmatpush1.msra.mxu0 0.0
    %152 = vmatprep.subr.mxu0 0.0
    %153 = vmatpush1.msra.mxu0 0.0
    %154 = vmatprep.subr.mxu0 0.0
    %155 = vmatpush1.msra.mxu0 0.0
    %156 = vmatprep.subr.mxu0 0.0
    %157 = vmatpush1.msra.mxu0 0.0
    %158 = vmatprep.subr.mxu0 0.0
    %159 = vmatpush1.msra.mxu0 0.0
    %160 = vmatprep.subr.mxu0 0.0
    %161 = vmatpush1.msra.mxu0 0.0
    %162 = vmatprep.subr.mxu0 0.0
    %163 = vmatpush1.msra.mxu0 0.0
    %164 = vmatprep.subr.mxu0 0.0
    %165 = vmatpush1.msra.mxu0 0.0
    %166 = vmatprep.mubr.f32.mxu0 0.0
    %167 = vmatmul.mubr.f32.gmra.mrb[0].mxu0 %v77
    %v168 = vpop.f32.mrb[0].mxu0
    %v169 = vadd.f32 %v100, %v168
    %v170 = vpop.f32.mrb[0].mxu0
    %171 = vmatprep.mubr.f32.mxu0 0.0
    %172 = vmatmul.mubr.f32.gmra.mrb[0].mxu0 %v78
    %v173 = vpop.f32.mrb[0].mxu0
    %v174 = vadd.f32 %v100, %v173
    %v175 = vpop.f32.mrb[0].mxu0
    %176 = vdwg.mxu0
    %v177 = vmax.f32 %v169, 0.0
    %v178 = vmax.f32 %v174, 0.0
    %v179 = vld [vmem:[#allocation2] sm:$0xff]
    %v180 = vld [vmem:[#allocation2 + $0x8] sm:$0xff]
    %v181 = vld [vmem:[#allocation8] sm:$0xff]
    %v182 = vld [vmem:[#allocation8 + $0x8] sm:$0xff]
    %v183 = vld [vmem:[#allocation8 + $0x10] sm:$0xff]
    %v184 = vld [vmem:[#allocation8 + $0x18] sm:$0xff]
    %v185 = vld [vmem:[#allocation8 + $0x20] sm:$0xff]
    %v186 = vld [vmem:[#allocation8 + $0x28] sm:$0xff]
    %v187 = vld [vmem:[#allocation8 + $0x30] sm:$0xff]
    %v188 = vld [vmem:[#allocation8 + $0x38] sm:$0xff]
    %v189 = vld [vmem:[#allocation8 + $0x40] sm:$0xff]
    %v190 = vld [vmem:[#allocation8 + $0x48] sm:$0xff]
    %v191 = vld [vmem:[#allocation8 + $0x50] sm:$0xff]
    %v192 = vld [vmem:[#allocation8 + $0x58] sm:$0xff]
    %v193 = vld [vmem:[#allocation8 + $0x60] sm:$0xff]
    %v194 = vld [vmem:[#allocation8 + $0x68] sm:$0xff]
    %v195 = vld [vmem:[#allocation8 + $0x70] sm:$0xff]
    %v196 = vld [vmem:[#allocation8 + $0x78] sm:$0xff]
    %197 = vmatprep.subr.mxu0 0.0
    %198 = vmatpush1.msra.mxu0 %v181
    %199 = vmatprep.subr.mxu0 0.0
    %200 = vmatpush1.msra.mxu0 %v182
    %201 = vmatprep.subr.mxu0 0.0
    %202 = vmatpush1.msra.mxu0 %v183
    %203 = vmatprep.subr.mxu0 0.0
    %204 = vmatpush1.msra.mxu0 %v184
    %205 = vmatprep.subr.mxu0 0.0
    %206 = vmatpush1.msra.mxu0 %v185
    %207 = vmatprep.subr.mxu0 0.0
    %208 = vmatpush1.msra.mxu0 %v186
    %209 = vmatprep.subr.mxu0 0.0
    %210 = vmatpush1.msra.mxu0 %v187
    %211 = vmatprep.subr.mxu0 0.0
    %212 = vmatpush1.msra.mxu0 %v188
    %213 = vmatprep.subr.mxu0 0.0
    %214 = vmatpush1.msra.mxu0 %v189
    %215 = vmatprep.subr.mxu0 0.0
    %216 = vmatpush1.msra.mxu0 %v190
    %217 = vmatprep.subr.mxu0 0.0
    %218 = vmatpush1.msra.mxu0 %v191
    %219 = vmatprep.subr.mxu0 0.0
    %220 = vmatpush1.msra.mxu0 %v192
    %221 = vmatprep.subr.mxu0 0.0
    %222 = vmatpush1.msra.mxu0 %v193
    %223 = vmatprep.subr.mxu0 0.0
    %224 = vmatpush1.msra.mxu0 %v194
    %225 = vmatprep.subr.mxu0 0.0
    %226 = vmatpush1.msra.mxu0 %v195
    %227 = vmatprep.subr.mxu0 0.0
    %228 = vmatpush1.msra.mxu0 %v196
    %229 = vmatprep.subr.mxu0 0.0
    %230 = vmatpush1.msra.mxu0 0.0
    %231 = vmatprep.subr.mxu0 0.0
    %232 = vmatpush1.msra.mxu0 0.0
    %233 = vmatprep.subr.mxu0 0.0
    %234 = vmatpush1.msra.mxu0 0.0
    %235 = vmatprep.subr.mxu0 0.0
    %236 = vmatpush1.msra.mxu0 0.0
    %237 = vmatprep.subr.mxu0 0.0
    %238 = vmatpush1.msra.mxu0 0.0
    %239 = vmatprep.subr.mxu0 0.0
    %240 = vmatpush1.msra.mxu0 0.0
    %241 = vmatprep.subr.mxu0 0.0
    %242 = vmatpush1.msra.mxu0 0.0
    %243 = vmatprep.subr.mxu0 0.0
    %244 = vmatpush1.msra.mxu0 0.0
    %245 = vmatprep.subr.mxu0 0.0
    %246 = vmatpush1.msra.mxu0 0.0
    %247 = vmatprep.subr.mxu0 0.0
    %248 = vmatpush1.msra.mxu0 0.0
    %249 = vmatprep.subr.mxu0 0.0
    %250 = vmatpush1.msra.mxu0 0.0
    %251 = vmatprep.subr.mxu0 0.0
    %252 = vmatpush1.msra.mxu0 0.0
    %253 = vmatprep.subr.mxu0 0.0
    %254 = vmatpush1.msra.mxu0 0.0
    %255 = vmatprep.subr.mxu0 0.0
    %256 = vmatpush1.msra.mxu0 0.0
    %257 = vmatprep.subr.mxu0 0.0
    %258 = vmatpush1.msra.mxu0 0.0
    %259 = vmatprep.subr.mxu0 0.0
    %260 = vmatpush1.msra.mxu0 0.0
    %261 = vmatprep.mubr.f32.mxu0 0.0
    %262 = vmatmul.mubr.f32.gmra.mrb[0].mxu0 %v177
    %v263 = vpop.f32.mrb[0].mxu0
    %v264 = vadd.f32 0.0, %v263
    %v265 = vpop.f32.mrb[0].mxu0
    %266 = vmatprep.mubr.f32.mxu0 0.0
    %267 = vmatmul.mubr.f32.gmra.mrb[0].mxu0 %v178
    %v268 = vpop.f32.mrb[0].mxu0
    %v269 = vadd.f32 0.0, %v268
    %v270 = vpop.f32.mrb[0].mxu0
    %271 = vdwg.mxu0
    %v272 = vadd.f32 %v179, %v264
    %v273 = vadd.f32 %v180, %v269
    %274 = vst [vmem:[#allocation2] sm:$0xff] %v272
    %275 = vst [vmem:[#allocation2 + $0x8] sm:$0xff] %v273
    // Predicated region
    $region50: #{tpu_custom_call.1} parent=1 // pred_check
      %p276 = pneg %p71
    $region51: #{tpu_custom_call.1} parent=1 // pred_check_branch
      %278 = sbr.rel (%p276) target = $region53
    $region52: #{tpu_custom_call.1} parent=1 // pred_region
      %v279 = vld [vmem:[#allocation2] sm:$0xff]
      %v280 = vld [vmem:[#allocation2 + $0x8] sm:$0xff]
      %v281 = vld [vmem:[%s4] sm:$0x1]
      %v283 = vlaneseq
      %v284 = vshrl.u32 %v283, 7
      %v285 = vsub.s32 0, %v284
      %v286 = vrot.slane %v281, %v285
      %v288 = vadd.f32 %v279, %v286
      %v289 = vadd.f32 %v280, %v286
      %v290 = vadd.f32 %v288, %v77
      %v291 = vadd.f32 %v289, %v78
      %292 = vadd.xlane.f32.xlu0 %v290
      %v293 = vpop.xlane.xlu0 %292
      %294 = vadd.xlane.f32.xlu0 %v291
      %v295 = vpop.xlane.xlu0 %294
      %v296 = vmul.f32 %v293, 0.03125
      %v297 = vmul.f32 %v295, 0.03125
      %v298 = vsub.f32 %v290, %v296
      %v299 = vsub.f32 %v291, %v297
      %v300 = vld [vmem:[%s7] sm:$0x1]
      %v302 = vlaneseq
      %v303 = vshrl.u32 %v302, 7
      %v304 = vsub.s32 0, %v303
      %v305 = vrot.slane %v300, %v304
      %v307 = vmul.f32 %v298, %v305
      %v308 = vmul.f32 %v299, %v305
      %v309 = vmul.f32 %v307, %v307
      %v310 = vmul.f32 %v308, %v308
      %311 = vadd.xlane.f32.xlu0 %v309
      %v312 = vpop.xlane.xlu0 %311
      %313 = vadd.xlane.f32.xlu0 %v310
      %v314 = vpop.xlane.xlu0 %313
      %v315 = vmul.f32 %v312, 0.03125
      %v316 = vmul.f32 %v314, 0.03125
      %v317 = vadd.f32 %v315, 1e-05
      %v318 = vadd.f32 %v316, 1e-05
      %v319 = vrsqrt.pop %v317
      %v320 = vrsqrt.pop %v318
      %v321 = vmul.f32 %v307, %v319
      %v322 = vmul.f32 %v308, %v320
      %v323 = vld [vmem:[%s5] sm:$0x1]
      %v325 = vlaneseq
      %v326 = vshrl.u32 %v325, 7
      %v327 = vsub.s32 0, %v326
      %v328 = vrot.slane %v323, %v327
      %v330 = vmul.f32 %v321, %v328
      %v331 = vmul.f32 %v322, %v328
      %v332 = vld [vmem:[%s6] sm:$0x1]
      %v334 = vlaneseq
      %v335 = vshrl.u32 %v334, 7
      %v336 = vsub.s32 0, %v335
      %v337 = vrot.slane %v332, %v336
      %v339 = vadd.f32 %v330, %v337
      %v340 = vadd.f32 %v331, %v337
      %341 = vst [vmem:[#allocation9] sm:$0xff] %v339
      %342 = vst [vmem:[#allocation9 + $0x8] sm:$0xff] %v340
    $region53: #{tpu_custom_call.1} parent=1 // pred_fallthru
      _
    // Predicated region
    $region54: #{tpu_custom_call.1} parent=1 // pred_check
      _
    $region55: #{tpu_custom_call.1} parent=1 // pred_check_branch
      %344 = sbr.rel (0) target = $region57
    $region56: #{tpu_custom_call.1} parent=1 // pred_region
      %s346 = ssub.s32 256, 256
      %347 = vsyncadd [#allocation5], %s346
      %s348 = sshll.u32 [#allocation9], 4
      %s349 = int_to_ptr.vmem [resolvable:$true] %s348
      %354 = dma.vmem_to_hbm [thread:$0]  %s349, 256, %s8, [#allocation5], 128, 128, 8
    $region57: #{tpu_custom_call.1} parent=1 // pred_fallthru
      _
    // Predicated region
    $region58: #{tpu_custom_call.1} parent=1 // pred_check
      _
    $region59: #{tpu_custom_call.1} parent=1 // pred_check_branch
      %356 = sbr.rel (0) target = $region61
    $region60: #{tpu_custom_call.1} parent=1 // pred_region
      %357 = dma.done [#allocation5], 256
    $region61: #{tpu_custom_call.1} parent=1 // pred_fallthru
      _
    %358 = vsyncpa [#allocation4], 1
    %359 = vsyncpa [#allocation7], 1
    %360 = vsyncpa [#allocation5], 1

</llo_original>
